<compile_context>
chip_gen: v7x
topology: tpu7x:2x2x1
jax: 0.10.0
libtpu: 0.0.40
codegen_flags: <defaults>
</compile_context>

<pallas_src>
import functools

import jax
import jax.numpy as jnp
from jax.experimental import pallas as pl
from jax.experimental.pallas import tpu as pltpu

HIDDEN = 32          # torch module hardcodes 32-wide hidden layers (hidden_dim arg unused)
LANE = 128           # TPU lane width: every feature axis padded to 128 (dense vld/vst)
ROW_ALIGN = 16       # batch-tile granularity: 16 rows = bf16 sublane tile (also f32-safe)
TILE_VMEM_BUDGET = 24 * 1024 * 1024   # cap on double-buffered tile VMEM (safe on v7x 64 MiB)


def _round_up(n, m):
    return -(-n // m) * m


def _dqn_kernel(x_ref, w1_ref, wh_ref, b_ref, o_ref):
    """Whole DQN forward for one batch tile.

    x_ref : (tb, S)        f32   input tile
    w1_ref: (S, 128)       bf16  layer-1 weight, out-cols zero-padded 32 -> 128
    wh_ref: (3, 128, 128)  bf16  layers 2..4 weights, zero-padded to 128x128 each
    b_ref : (4, 128)       f32   biases b1..b4, each zero-padded to 128 lanes
    o_ref : (tb, 128)      bf16  lane-dense output tile (columns A..127 are exactly zero)
    """
    b = b_ref[...]                                            # (4, 128) f32
    # bf16 operands -> single-pass MXU issue; accumulate in f32; bias/ReLU stay f32.
    h = jnp.dot(x_ref[...].astype(jnp.bfloat16), w1_ref[...],
                preferred_element_type=jnp.float32) + b[0:1, :]
    h = jnp.maximum(h, 0.0)
    h = jnp.dot(h.astype(jnp.bfloat16), wh_ref[0],
                preferred_element_type=jnp.float32) + b[1:2, :]
    h = jnp.maximum(h, 0.0)
    h = jnp.dot(h.astype(jnp.bfloat16), wh_ref[1],
                preferred_element_type=jnp.float32) + b[2:3, :]
    h = jnp.maximum(h, 0.0)
    o_ref[...] = (jnp.dot(h.astype(jnp.bfloat16), wh_ref[2],
                          preferred_element_type=jnp.float32)
                  + b[3:4, :]).astype(o_ref.dtype)


def _pack_params(params):
    """Pad / stack the (in,out)-layout weights into lane-dense kernel operands."""
    def pad_cols(w):
        return jnp.pad(w, ((0, 0), (0, LANE - w.shape[-1])))

    w1 = pad_cols(params["w1"]).astype(jnp.bfloat16)                         # (S, 128)
    w2 = jnp.pad(params["w2"], ((0, LANE - HIDDEN), (0, LANE - HIDDEN)))     # (128, 128)
    w3 = jnp.pad(params["w3"], ((0, LANE - HIDDEN), (0, LANE - HIDDEN)))     # (128, 128)
    w4 = jnp.pad(params["w4"],
                 ((0, LANE - HIDDEN), (0, LANE - params["w4"].shape[1])))    # (128, 128)
    wh = jnp.stack([w2, w3, w4]).astype(jnp.bfloat16)                        # (3, 128, 128)
    biases = jnp.stack([pad_cols(params[f"b{i}"])[0] for i in range(1, 5)])  # (4, 128) f32
    return w1, wh, biases


@functools.partial(jax.jit, static_argnames=("batch_tile",))
def dqn_forward(x, params, *, batch_tile=2048):
    """Pallas forward pass for the DQN MLP.

    x:      (B, state_dim), any float/int dtype (cast to f32, mirroring x.float())
    params: dict with w1 (S,32), b1 (1,32), w2 (32,32), b2 (1,32),
            w3 (32,32), b3 (1,32), w4 (32,A), b4 (1,A)
    """
    x = jnp.asarray(x, jnp.float32)
    B, S = x.shape
    A = params["w4"].shape[1]

    w1, wh, biases = _pack_params(params)

    # ---- batch tile selection ------------------------------------------------------
    batch_tile = max(ROW_ALIGN, batch_tile // ROW_ALIGN * ROW_ALIGN)
    if B > batch_tile:
        tb = batch_tile
    elif B >= 128:
        # Split into >=2 grid steps so the "parallel" axis feeds both v7x TensorCores.
        tb = _round_up(_round_up(B, 2) // 2, ROW_ALIGN)
    else:
        tb = _round_up(B, ROW_ALIGN)

    # VMEM accounting (bytes): double-buffered x (f32) + out (bf16) tiles, plus resident
    # weights (conservatively counted as double-buffered too). Clamp the tile so even a
    # user-supplied huge batch_tile stays within budget on v7x's 64 MiB VMEM.
    weight_bytes = 2 * (2 * w1.size + 2 * wh.size + 4 * biases.size)
    per_row = 2 * (4 * S + 2 * LANE)
    max_tb = max(ROW_ALIGN,
                 ((TILE_VMEM_BUDGET - weight_bytes) // per_row) // ROW_ALIGN * ROW_ALIGN)
    tb = min(tb, max_tb)

    Bp = _round_up(B, tb)
    if Bp != B:
        x = jnp.pad(x, ((0, Bp - B), (0, 0)))
    grid = (Bp // tb,)

    vmem_need = tb * per_row + weight_bytes
    cp = dict(dimension_semantics=("parallel",))
    if vmem_need > 12 * 1024 * 1024:         # only override the conservative defaults
        try:
            vmem_cap = pltpu.get_tpu_info().vmem_capacity_bytes
        except Exception:
            vmem_cap = 64 * 1024 * 1024      # assume the smallest (v7x per-TC) if unknown
        ceiling = max(vmem_need, int(vmem_cap * 5 // 8))   # ~40 MiB on v7x, never < need
        cp["vmem_limit_bytes"] = min(max(int(vmem_need * 3 // 2),
                                         vmem_need + (2 << 20)), ceiling)

    flops = 2 * Bp * (S * HIDDEN + 2 * HIDDEN * HIDDEN + HIDDEN * A)
    bytes_accessed = (4 * Bp * S + 2 * Bp * LANE
                      + 2 * (w1.size + wh.size) + 4 * biases.size)

    out = pl.pallas_call(
        _dqn_kernel,
        out_shape=jax.ShapeDtypeStruct((Bp, LANE), jnp.bfloat16),
        grid_spec=pltpu.PrefetchScalarGridSpec(
            num_scalar_prefetch=0,
            grid=grid,
            in_specs=[
                pl.BlockSpec((tb, S), lambda i: (i, 0)),      # batch tile of x
                pl.BlockSpec(w1.shape, lambda i: (0, 0)),     # full w1 (resident)
                pl.BlockSpec(wh.shape, lambda i: (0, 0, 0)),  # stacked w2/w3/w4 (resident)
                pl.BlockSpec(biases.shape, lambda i: (0, 0)), # packed biases (resident)
            ],
            out_specs=pl.BlockSpec((tb, LANE), lambda i: (i, 0)),
        ),
        compiler_params=pltpu.CompilerParams(**cp),
        cost_estimate=pl.CostEstimate(
            flops=flops, transcendentals=0, bytes_accessed=bytes_accessed),
    )(x, w1, wh, biases)

    # Padded lanes A..127 are exactly 0 and padded batch rows hold relu-of-bias garbage;
    # the slice below is what makes that safe. (If an argmax were ever fused in-kernel,
    # lanes >= A would have to be masked to -inf first.)
    return out[:B, :A].astype(jnp.float32)


def init_dqn_params(key, state_dim, num_actions):
    """Init mimicking torch.nn.Linear default (U[-1/sqrt(fan_in), 1/sqrt(fan_in)])."""
    dims = [(state_dim, HIDDEN), (HIDDEN, HIDDEN), (HIDDEN, HIDDEN), (HIDDEN, num_actions)]
    params = {}
    for idx, (fan_in, fan_out) in enumerate(dims, start=1):
        key, kw, kb = jax.random.split(key, 3)
        bound = 1.0 / jnp.sqrt(jnp.float32(fan_in))
        params[f"w{idx}"] = jax.random.uniform(
            kw, (fan_in, fan_out), jnp.float32, -bound, bound)
        params[f"b{idx}"] = jax.random.uniform(
            kb, (1, fan_out), jnp.float32, -bound, bound)
    return params


def dqn_reference(x, params):
    """Pure f32 reference (bit-for-bit PyTorch semantics)."""
    x = x.astype(jnp.float32)
    h = jnp.maximum(x @ params["w1"] + params["b1"], 0.0)
    h = jnp.maximum(h @ params["w2"] + params["b2"], 0.0)
    h = jnp.maximum(h @ params["w3"] + params["b3"], 0.0)
    return h @ params["w4"] + params["b4"]


def dqn_reference_bf16(x, params):
    """Reference emulating the kernel's bf16-operand / f32-accumulate matmuls."""
    bf = jnp.bfloat16

    def lin(h, w, b):
        return jnp.dot(h.astype(bf), w.astype(bf),
                       preferred_element_type=jnp.float32) + b

    h = jnp.maximum(lin(x.astype(jnp.float32), params["w1"], params["b1"]), 0.0)
    h = jnp.maximum(lin(h, params["w2"], params["b2"]), 0.0)
    h = jnp.maximum(lin(h, params["w3"], params["b3"]), 0.0)
    return lin(h, params["w4"], params["b4"])


if __name__ == "__main__":
    state_dim, hidden_dim, num_actions = 16, 32, 4   # hidden_dim unused, as in torch module

    key = jax.random.PRNGKey(0)
    key, kx1, kx2, kx3 = jax.random.split(key, 4)
    params = init_dqn_params(key, state_dim, num_actions)

    def check(x, y):
        assert y.shape == (x.shape[0], num_actions)
        # Tight check vs a bf16-operand reference; loose check vs the pure-f32 reference
        # (bf16 matmul operands deviate ~1e-2 relative from f32, acceptable for DQN).
        assert jnp.allclose(y, dqn_reference_bf16(x, params), atol=1e-2, rtol=1e-2)
        assert jnp.allclose(y, dqn_reference(x, params), atol=1e-1, rtol=1e-1)

    # Small batch: single grid step (grid=1), whole batch in one tile.
    x_small = jax.random.normal(kx1, (8, state_dim), jnp.float32)
    y_small = dqn_forward(x_small, params)
    jax.block_until_ready(y_small)
    check(x_small, y_small)

    # Medium batch (>=128): early 2-way split -> grid=2 so both v7x TensorCores get work.
    x_mid = jax.random.normal(kx2, (200, state_dim), jnp.float32)
    y_mid = dqn_forward(x_mid, params)
    jax.block_until_ready(y_mid)
    check(x_mid, y_mid)

    # Ragged, multi-tile batch: exercises row padding + grid > 2 ("parallel" axis).
    x_big = jax.random.normal(kx3, (50, state_dim), jnp.float32)
    y_big = dqn_forward(x_big, params, batch_tile=16)
    jax.block_until_ready(y_big)
    check(x_big, y_big)

    print("KERNEL_OK")
</pallas_src>

<mosaic_0001>
module attributes {stable_mosaic.version = 11 : i64} {
  func.func @_dqn_kernel(%arg0: i32, %arg1: memref<16x16xf32, #tpu.memory_space<vmem>>, %arg2: memref<16x128xbf16, #tpu.memory_space<vmem>>, %arg3: memref<3x128x128xbf16, #tpu.memory_space<vmem>>, %arg4: memref<4x128xf32, #tpu.memory_space<vmem>>, %arg5: memref<16x128xbf16, #tpu.memory_space<vmem>>) attributes {dimension_semantics = [#tpu.dimension_semantics<parallel>], iteration_bounds = array<i64: 1>, scalar_prefetch = 0 : i64, scratch_operands = 0 : i64, tpu.core_type = #tpu.core_type<tc>, window_params = [{transform_indices = @transform_0, window_bounds = array<i64: 16, 16>}, {pipeline_mode = #tpu.pipeline_mode<synchronous>, transform_indices = @transform_1, window_bounds = array<i64: 16, 128>}, {pipeline_mode = #tpu.pipeline_mode<synchronous>, transform_indices = @transform_2, window_bounds = array<i64: 3, 128, 128>}, {pipeline_mode = #tpu.pipeline_mode<synchronous>, transform_indices = @transform_3, window_bounds = array<i64: 4, 128>}, {transform_indices = @transform_4, window_bounds = array<i64: 16, 128>}]} {
    %c0 = arith.constant 0 : index
    %c0_0 = arith.constant 0 : index
    %0 = vector.load %arg4[%c0, %c0_0] : memref<4x128xf32, #tpu.memory_space<vmem>>, vector<4x128xf32>
    %c0_1 = arith.constant 0 : index
    %c0_2 = arith.constant 0 : index
    %1 = vector.load %arg1[%c0_1, %c0_2] : memref<16x16xf32, #tpu.memory_space<vmem>>, vector<16x16xf32>
    %2 = arith.truncf %1 : vector<16x16xf32> to vector<16x16xbf16>
    %c0_3 = arith.constant 0 : index
    %c0_4 = arith.constant 0 : index
    %3 = vector.load %arg2[%c0_3, %c0_4] : memref<16x128xbf16, #tpu.memory_space<vmem>>, vector<16x128xbf16>
    %cst = arith.constant dense<0.000000e+00> : vector<16x128xf32>
    %4 = tpu.matmul %2, %3, %cst {dimension_numbers = #tpu.dot_dimension_numbers<[1], [0], [0], [1], [0, 0, 1, 1], [], []>} : vector<16x16xbf16>, vector<16x128xbf16>, vector<16x128xf32> -> vector<16x128xf32>
    %5 = vector.extract_strided_slice %0 {offsets = [0, 0], sizes = [1, 128], strides = [1, 1]} : vector<4x128xf32> to vector<1x128xf32>
    %6 = vector.broadcast %5 : vector<1x128xf32> to vector<16x128xf32>
    %7 = arith.addf %4, %6 : vector<16x128xf32>
    %cst_5 = arith.constant 0.000000e+00 : f32
    %8 = vector.broadcast %cst_5 : f32 to vector<16x128xf32>
    %9 = arith.maximumf %7, %8 : vector<16x128xf32>
    %10 = arith.truncf %9 : vector<16x128xf32> to vector<16x128xbf16>
    %c0_6 = arith.constant 0 : index
    %c0_7 = arith.constant 0 : index
    %c0_8 = arith.constant 0 : index
    %11 = vector.load %arg3[%c0_6, %c0_7, %c0_8] : memref<3x128x128xbf16, #tpu.memory_space<vmem>>, vector<1x128x128xbf16>
    %12 = vector.shape_cast %11 : vector<1x128x128xbf16> to vector<128x128xbf16>
    %cst_9 = arith.constant dense<0.000000e+00> : vector<16x128xf32>
    %13 = tpu.matmul %10, %12, %cst_9 {dimension_numbers = #tpu.dot_dimension_numbers<[1], [0], [0], [1], [0, 0, 1, 1], [], []>} : vector<16x128xbf16>, vector<128x128xbf16>, vector<16x128xf32> -> vector<16x128xf32>
    %14 = vector.extract_strided_slice %0 {offsets = [1, 0], sizes = [1, 128], strides = [1, 1]} : vector<4x128xf32> to vector<1x128xf32>
    %15 = vector.broadcast %14 : vector<1x128xf32> to vector<16x128xf32>
    %16 = arith.addf %13, %15 : vector<16x128xf32>
    %cst_10 = arith.constant 0.000000e+00 : f32
    %17 = vector.broadcast %cst_10 : f32 to vector<16x128xf32>
    %18 = arith.maximumf %16, %17 : vector<16x128xf32>
    %19 = arith.truncf %18 : vector<16x128xf32> to vector<16x128xbf16>
    %c1 = arith.constant 1 : index
    %c0_11 = arith.constant 0 : index
    %c0_12 = arith.constant 0 : index
    %20 = vector.load %arg3[%c1, %c0_11, %c0_12] : memref<3x128x128xbf16, #tpu.memory_space<vmem>>, vector<1x128x128xbf16>
    %21 = vector.shape_cast %20 : vector<1x128x128xbf16> to vector<128x128xbf16>
    %cst_13 = arith.constant dense<0.000000e+00> : vector<16x128xf32>
    %22 = tpu.matmul %19, %21, %cst_13 {dimension_numbers = #tpu.dot_dimension_numbers<[1], [0], [0], [1], [0, 0, 1, 1], [], []>} : vector<16x128xbf16>, vector<128x128xbf16>, vector<16x128xf32> -> vector<16x128xf32>
    %23 = vector.extract_strided_slice %0 {offsets = [2, 0], sizes = [1, 128], strides = [1, 1]} : vector<4x128xf32> to vector<1x128xf32>
    %24 = vector.broadcast %23 : vector<1x128xf32> to vector<16x128xf32>
    %25 = arith.addf %22, %24 : vector<16x128xf32>
    %cst_14 = arith.constant 0.000000e+00 : f32
    %26 = vector.broadcast %cst_14 : f32 to vector<16x128xf32>
    %27 = arith.maximumf %25, %26 : vector<16x128xf32>
    %28 = arith.truncf %27 : vector<16x128xf32> to vector<16x128xbf16>
    %c2 = arith.constant 2 : index
    %c0_15 = arith.constant 0 : index
    %c0_16 = arith.constant 0 : index
    %29 = vector.load %arg3[%c2, %c0_15, %c0_16] : memref<3x128x128xbf16, #tpu.memory_space<vmem>>, vector<1x128x128xbf16>
    %30 = vector.shape_cast %29 : vector<1x128x128xbf16> to vector<128x128xbf16>
    %cst_17 = arith.constant dense<0.000000e+00> : vector<16x128xf32>
    %31 = tpu.matmul %28, %30, %cst_17 {dimension_numbers = #tpu.dot_dimension_numbers<[1], [0], [0], [1], [0, 0, 1, 1], [], []>} : vector<16x128xbf16>, vector<128x128xbf16>, vector<16x128xf32> -> vector<16x128xf32>
    %32 = vector.extract_strided_slice %0 {offsets = [3, 0], sizes = [1, 128], strides = [1, 1]} : vector<4x128xf32> to vector<1x128xf32>
    %33 = vector.broadcast %32 : vector<1x128xf32> to vector<16x128xf32>
    %34 = arith.addf %31, %33 : vector<16x128xf32>
    %35 = arith.truncf %34 : vector<16x128xf32> to vector<16x128xbf16>
    %c0_18 = arith.constant 0 : index
    %c0_19 = arith.constant 0 : index
    %36 = vector.load %arg5[%c0_18, %c0_19] : memref<16x128xbf16, #tpu.memory_space<vmem>>, vector<16x128xbf16>
    tpu.vector_store %arg5[%c0_18, %c0_19], %35 {strides = array<i32>} : memref<16x128xbf16, #tpu.memory_space<vmem>>, vector<16x128xbf16>,
    return
  }
  func.func @transform_0(%arg0: i32) -> (i32, i32) {
    %c0_i32 = arith.constant 0 : i32
    %c0_i32_0 = arith.constant 0 : i32
    return %arg0, %c0_i32 : i32, i32
  }
  func.func @transform_1(%arg0: i32) -> (i32, i32) {
    %c0_i32 = arith.constant 0 : i32
    %c0_i32_0 = arith.constant 0 : i32
    %c0_i32_1 = arith.constant 0 : i32
    return %c0_i32, %c0_i32_0 : i32, i32
  }
  func.func @transform_2(%arg0: i32) -> (i32, i32, i32) {
    %c0_i32 = arith.constant 0 : i32
    %c0_i32_0 = arith.constant 0 : i32
    %c0_i32_1 = arith.constant 0 : i32
    %c0_i32_2 = arith.constant 0 : i32
    return %c0_i32, %c0_i32_0, %c0_i32_1 : i32, i32, i32
  }
  func.func @transform_3(%arg0: i32) -> (i32, i32) {
    %c0_i32 = arith.constant 0 : i32
    %c0_i32_0 = arith.constant 0 : i32
    %c0_i32_1 = arith.constant 0 : i32
    return %c0_i32, %c0_i32_0 : i32, i32
  }
  func.func @transform_4(%arg0: i32) -> (i32, i32) {
    %c0_i32 = arith.constant 0 : i32
    %c0_i32_0 = arith.constant 0 : i32
    return %arg0, %c0_i32 : i32, i32
  }
}

</mosaic_0001>

<llo_original>
// kernel: dqn_forward.1
$region0: #{dqn_forward.1}
  #allocation0 [shape = 'u32[]', space=smem, size = 0x4, offset = 0x4, fixed_abs, tag = 'smem constant byte address 0x4 - core index']
  #allocation1 [shape = 'u32[144,128]{1,0:T(1,128)}', space=vmem, size = 0x12000, scoped, tag = 'internal scratch']
  %s0 = inlined_call_operand.vmem [shape: f32[16,16], index: 0, kind: input, shape index: {}]
  %s1 = inlined_call_operand.vmem [shape: bf16[16,128], index: 1, kind: input, shape index: {}]
  %s2 = inlined_call_operand.vmem [shape: bf16[3,128,128], index: 2, kind: input, shape index: {}]
  %s3 = inlined_call_operand.vmem [shape: f32[4,128], index: 3, kind: input, shape index: {}]
  %s4 = inlined_call_operand.vmem [shape: bf16[16,128], index: 4, kind: output, shape index: {}]
  %s5 = sld [smem:[#allocation0]]
  $region26: #{dqn_forward.1} parent=0
    _
  %s7 = ssub.s32 1, %s5
  %s8 = scalar_select 0, %s7, %s5
  // Predicated region
  $region2: #{dqn_forward.1} parent=0 // pred_check
    _
  $region3: #{dqn_forward.1} parent=0 // pred_check_branch
    %10 = sbr.rel (0) target = $region5
  $region4: #{dqn_forward.1} parent=0 // pred_region
    _
  $region5: #{dqn_forward.1} parent=0 // pred_fallthru
    _
  // Predicated region
  $region6: #{dqn_forward.1} parent=0 // pred_check
    _
  $region7: #{dqn_forward.1} parent=0 // pred_check_branch
    %12 = sbr.rel (0) target = $region9
  $region8: #{dqn_forward.1} parent=0 // pred_region
    _
  $region9: #{dqn_forward.1} parent=0 // pred_fallthru
    _
  // Predicated region
  $region10: #{dqn_forward.1} parent=0 // pred_check
    _
  $region11: #{dqn_forward.1} parent=0 // pred_check_branch
    %14 = sbr.rel (0) target = $region13
  $region12: #{dqn_forward.1} parent=0 // pred_region
    _
  $region13: #{dqn_forward.1} parent=0 // pred_fallthru
    _
  // Predicated region
  $region14: #{dqn_forward.1} parent=0 // pred_check
    _
  $region15: #{dqn_forward.1} parent=0 // pred_check_branch
    %16 = sbr.rel (0) target = $region17
  $region16: #{dqn_forward.1} parent=0 // pred_region
    _
  $region17: #{dqn_forward.1} parent=0 // pred_fallthru
    _
  %v18 = vld [vmem:[%s3] sm:$0xf]
  %v19 = vld [vmem:[%s0] sm:$0xff]
  %v20 = vld [vmem:[%s0 + $0x8] sm:$0xff]
  %v21 = vpack.c.bf16 %v20, %v19
  %v22 = vld [vmem:[%s1] sm:$0xf]
  %v23 = vld [vmem:[%s1 + $0x4] sm:$0xf]
  %v24 = vlaneseq
  %v25 = vshrl.u32 %v24, 7
  %v26 = vsub.s32 0, %v25
  %v27 = vrot.slane %v18, %v26
  %v30 = vunpack.c.l.b16 %v22
  %v31 = vunpack.c.l.b16 %v23
  %v32 = vpack.c.b16 %v31, %v30
  %vm34 = vcmask 130048
  %v36 = vsel %vm34, %v21, 0
  %38 = vmatprep.subr.bf16.mxu0 0
  %39 = vmatpush1.bf16.msra.mxu0 %v32
  %40 = vmatprep.subr.bf16.mxu0 0
  %41 = vmatpush1.bf16.msra.mxu0 0
  %42 = vmatprep.subr.bf16.mxu0 0
  %43 = vmatpush1.bf16.msra.mxu0 0
  %44 = vmatprep.subr.bf16.mxu0 0
  %45 = vmatpush1.bf16.msra.mxu0 0
  %46 = vmatprep.subr.bf16.mxu0 0
  %47 = vmatpush1.bf16.msra.mxu0 0
  %48 = vmatprep.subr.bf16.mxu0 0
  %49 = vmatpush1.bf16.msra.mxu0 0
  %50 = vmatprep.subr.bf16.mxu0 0
  %51 = vmatpush1.bf16.msra.mxu0 0
  %52 = vmatprep.subr.bf16.mxu0 0
  %53 = vmatpush1.bf16.msra.mxu0 0
  %54 = vmatprep.subr.bf16.mxu0 0
  %55 = vmatpush1.bf16.msra.mxu0 0
  %56 = vmatprep.subr.bf16.mxu0 0
  %57 = vmatpush1.bf16.msra.mxu0 0
  %58 = vmatprep.subr.bf16.mxu0 0
  %59 = vmatpush1.bf16.msra.mxu0 0
  %60 = vmatprep.subr.bf16.mxu0 0
  %61 = vmatpush1.bf16.msra.mxu0 0
  %62 = vmatprep.subr.bf16.mxu0 0
  %63 = vmatpush1.bf16.msra.mxu0 0
  %64 = vmatprep.subr.bf16.mxu0 0
  %65 = vmatpush1.bf16.msra.mxu0 0
  %66 = vmatprep.subr.bf16.mxu0 0
  %67 = vmatpush1.bf16.msra.mxu0 0
  %68 = vmatprep.subr.bf16.mxu0 0
  %69 = vmatpush1.bf16.msra.mxu0 0
  %70 = vmatprep.mubr.bf16.mxu0 0
  %71 = vmatmul.mubr.bf16.gmra.mrb[0].mxu0 %v36
  %v72 = vpop.f32.mrb[0].mxu0
  %v73 = vadd.f32 %v27, %v72
  %v74 = vpop.f32.mrb[0].mxu0
  %v75 = vpop.f32.mrb[0].mxu0
  %v76 = vadd.f32 %v27, %v75
  %v77 = vpop.f32.mrb[0].mxu0
  %78 = vdwg.mxu0
  %v79 = vmax.f32 %v73, 0.0
  %v80 = vmax.f32 %v76, 0.0
  %v81 = vpack.c.bf16 %v80, %v79
  %v82 = vld [vmem:[%s2] sm:$0xf]
  %v83 = vld [vmem:[%s2 + $0x4] sm:$0xf]
  %v84 = vld [vmem:[%s2 + $0x8] sm:$0xf]
  %v85 = vld [vmem:[%s2 + $0xc] sm:$0xf]
  %v86 = vld [vmem:[%s2 + $0x10] sm:$0xf]
  %v87 = vld [vmem:[%s2 + $0x14] sm:$0xf]
  %v88 = vld [vmem:[%s2 + $0x18] sm:$0xf]
  %v89 = vld [vmem:[%s2 + $0x1c] sm:$0xf]
  %v90 = vld [vmem:[%s2 + $0x20] sm:$0xf]
  %v91 = vld [vmem:[%s2 + $0x24] sm:$0xf]
  %v92 = vld [vmem:[%s2 + $0x28] sm:$0xf]
  %v93 = vld [vmem:[%s2 + $0x2c] sm:$0xf]
  %v94 = vld [vmem:[%s2 + $0x30] sm:$0xf]
  %v95 = vld [vmem:[%s2 + $0x34] sm:$0xf]
  %v96 = vld [vmem:[%s2 + $0x38] sm:$0xf]
  %v97 = vld [vmem:[%s2 + $0x3c] sm:$0xf]
  %v98 = vlaneseq
  %v99 = vshrl.u32 %v98, 7
  %v100 = vsub.s32 1, %v99
  %v101 = vrot.slane %v18, %v100
  %v118 = vunpack.c.l.b16 %v82
  %v119 = vunpack.c.l.b16 %v83
  %v120 = vunpack.c.l.b16 %v84
  %v121 = vunpack.c.l.b16 %v85
  %v122 = vunpack.c.l.b16 %v86
  %v123 = vunpack.c.l.b16 %v87
  %v124 = vunpack.c.l.b16 %v88
  %v125 = vunpack.c.l.b16 %v89
  %v126 = vunpack.c.l.b16 %v90
  %v127 = vunpack.c.l.b16 %v91
  %v128 = vunpack.c.l.b16 %v92
  %v129 = vunpack.c.l.b16 %v93
  %v130 = vunpack.c.l.b16 %v94
  %v131 = vunpack.c.l.b16 %v95
  %v132 = vunpack.c.l.b16 %v96
  %v133 = vunpack.c.l.b16 %v97
  %v134 = vpack.c.b16 %v119, %v118
  %v135 = vpack.c.b16 %v121, %v120
  %v136 = vpack.c.b16 %v123, %v122
  %v137 = vpack.c.b16 %v125, %v124
  %v138 = vpack.c.b16 %v127, %v126
  %v139 = vpack.c.b16 %v129, %v128
  %v140 = vpack.c.b16 %v131, %v130
  %v141 = vpack.c.b16 %v133, %v132
  %150 = vmatprep.subr.bf16.mxu0 0
  %151 = vmatpush1.bf16.msra.mxu0 %v134
  %152 = vmatprep.subr.bf16.mxu0 0
  %153 = vmatpush1.bf16.msra.mxu0 %v135
  %154 = vmatprep.subr.bf16.mxu0 0
  %155 = vmatpush1.bf16.msra.mxu0 %v136
  %156 = vmatprep.subr.bf16.mxu0 0
  %157 = vmatpush1.bf16.msra.mxu0 %v137
  %158 = vmatprep.subr.bf16.mxu0 0
  %159 = vmatpush1.bf16.msra.mxu0 %v138
  %160 = vmatprep.subr.bf16.mxu0 0
  %161 = vmatpush1.bf16.msra.mxu0 %v139
  %162 = vmatprep.subr.bf16.mxu0 0
  %163 = vmatpush1.bf16.msra.mxu0 %v140
  %164 = vmatprep.subr.bf16.mxu0 0
  %165 = vmatpush1.bf16.msra.mxu0 %v141
  %166 = vmatprep.subr.bf16.mxu0 0
  %167 = vmatpush1.bf16.msra.mxu0 0
  %168 = vmatprep.subr.bf16.mxu0 0
  %169 = vmatpush1.bf16.msra.mxu0 0
  %170 = vmatprep.subr.bf16.mxu0 0
  %171 = vmatpush1.bf16.msra.mxu0 0
  %172 = vmatprep.subr.bf16.mxu0 0
  %173 = vmatpush1.bf16.msra.mxu0 0
  %174 = vmatprep.subr.bf16.mxu0 0
  %175 = vmatpush1.bf16.msra.mxu0 0
  %176 = vmatprep.subr.bf16.mxu0 0
  %177 = vmatpush1.bf16.msra.mxu0 0
  %178 = vmatprep.subr.bf16.mxu0 0
  %179 = vmatpush1.bf16.msra.mxu0 0
  %180 = vmatprep.subr.bf16.mxu0 0
  %181 = vmatpush1.bf16.msra.mxu0 0
  %182 = vmatprep.mubr.bf16.mxu0 0
  %183 = vmatmul.mubr.bf16.gmra.mrb[0].mxu0 %v81
  %v184 = vpop.f32.mrb[0].mxu0
  %v185 = vadd.f32 %v101, %v184
  %v186 = vpop.f32.mrb[0].mxu0
  %v187 = vpop.f32.mrb[0].mxu0
  %v188 = vadd.f32 %v101, %v187
  %v189 = vpop.f32.mrb[0].mxu0
  %190 = vdwg.mxu0
  %v191 = vmax.f32 %v185, 0.0
  %v192 = vmax.f32 %v188, 0.0
  %v193 = vpack.c.bf16 %v192, %v191
  %s194 = scalar_lea.vmem %s2, 64
  %v195 = vld [vmem:[%s194] sm:$0xf]
  %v196 = vld [vmem:[%s194 + $0x4] sm:$0xf]
  %v197 = vld [vmem:[%s194 + $0x8] sm:$0xf]
  %v198 = vld [vmem:[%s194 + $0xc] sm:$0xf]
  %v199 = vld [vmem:[%s194 + $0x10] sm:$0xf]
  %v200 = vld [vmem:[%s194 + $0x14] sm:$0xf]
  %v201 = vld [vmem:[%s194 + $0x18] sm:$0xf]
  %v202 = vld [vmem:[%s194 + $0x1c] sm:$0xf]
  %v203 = vld [vmem:[%s194 + $0x20] sm:$0xf]
  %v204 = vld [vmem:[%s194 + $0x24] sm:$0xf]
  %v205 = vld [vmem:[%s194 + $0x28] sm:$0xf]
  %v206 = vld [vmem:[%s194 + $0x2c] sm:$0xf]
  %v207 = vld [vmem:[%s194 + $0x30] sm:$0xf]
  %v208 = vld [vmem:[%s194 + $0x34] sm:$0xf]
  %v209 = vld [vmem:[%s194 + $0x38] sm:$0xf]
  %v210 = vld [vmem:[%s194 + $0x3c] sm:$0xf]
  %v211 = vlaneseq
  %v212 = vshrl.u32 %v211, 7
  %v213 = vsub.s32 2, %v212
  %v214 = vrot.slane %v18, %v213
  %v231 = vunpack.c.l.b16 %v195
  %v232 = vunpack.c.l.b16 %v196
  %v233 = vunpack.c.l.b16 %v197
  %v234 = vunpack.c.l.b16 %v198
  %v235 = vunpack.c.l.b16 %v199
  %v236 = vunpack.c.l.b16 %v200
  %v237 = vunpack.c.l.b16 %v201
  %v238 = vunpack.c.l.b16 %v202
  %v239 = vunpack.c.l.b16 %v203
  %v240 = vunpack.c.l.b16 %v204
  %v241 = vunpack.c.l.b16 %v205
  %v242 = vunpack.c.l.b16 %v206
  %v243 = vunpack.c.l.b16 %v207
  %v244 = vunpack.c.l.b16 %v208
  %v245 = vunpack.c.l.b16 %v209
  %v246 = vunpack.c.l.b16 %v210
  %v247 = vpack.c.b16 %v232, %v231
  %v248 = vpack.c.b16 %v234, %v233
  %v249 = vpack.c.b16 %v236, %v235
  %v250 = vpack.c.b16 %v238, %v237
  %v251 = vpack.c.b16 %v240, %v239
  %v252 = vpack.c.b16 %v242, %v241
  %v253 = vpack.c.b16 %v244, %v243
  %v254 = vpack.c.b16 %v246, %v245
  %263 = vmatprep.subr.bf16.mxu0 0
  %264 = vmatpush1.bf16.msra.mxu0 %v247
  %265 = vmatprep.subr.bf16.mxu0 0
  %266 = vmatpush1.bf16.msra.mxu0 %v248
  %267 = vmatprep.subr.bf16.mxu0 0
  %268 = vmatpush1.bf16.msra.mxu0 %v249
  %269 = vmatprep.subr.bf16.mxu0 0
  %270 = vmatpush1.bf16.msra.mxu0 %v250
  %271 = vmatprep.subr.bf16.mxu0 0
  %272 = vmatpush1.bf16.msra.mxu0 %v251
  %273 = vmatprep.subr.bf16.mxu0 0
  %274 = vmatpush1.bf16.msra.mxu0 %v252
  %275 = vmatprep.subr.bf16.mxu0 0
  %276 = vmatpush1.bf16.msra.mxu0 %v253
  %277 = vmatprep.subr.bf16.mxu0 0
  %278 = vmatpush1.bf16.msra.mxu0 %v254
  %279 = vmatprep.subr.bf16.mxu0 0
  %280 = vmatpush1.bf16.msra.mxu0 0
  %281 = vmatprep.subr.bf16.mxu0 0
  %282 = vmatpush1.bf16.msra.mxu0 0
  %283 = vmatprep.subr.bf16.mxu0 0
  %284 = vmatpush1.bf16.msra.mxu0 0
  %285 = vmatprep.subr.bf16.mxu0 0
  %286 = vmatpush1.bf16.msra.mxu0 0
  %287 = vmatprep.subr.bf16.mxu0 0
  %288 = vmatpush1.bf16.msra.mxu0 0
  %289 = vmatprep.subr.bf16.mxu0 0
  %290 = vmatpush1.bf16.msra.mxu0 0
  %291 = vmatprep.subr.bf16.mxu0 0
  %292 = vmatpush1.bf16.msra.mxu0 0
  %293 = vmatprep.subr.bf16.mxu0 0
  %294 = vmatpush1.bf16.msra.mxu0 0
  %295 = vmatprep.mubr.bf16.mxu0 0
  %296 = vmatmul.mubr.bf16.gmra.mrb[0].mxu0 %v193
  %v297 = vpop.f32.mrb[0].mxu0
  %v298 = vadd.f32 %v214, %v297
  %v299 = vpop.f32.mrb[0].mxu0
  %v300 = vpop.f32.mrb[0].mxu0
  %v301 = vadd.f32 %v214, %v300
  %v302 = vpop.f32.mrb[0].mxu0
  %303 = vdwg.mxu0
  %v304 = vmax.f32 %v298, 0.0
  %v305 = vmax.f32 %v301, 0.0
  %v306 = vpack.c.bf16 %v305, %v304
  %s307 = scalar_lea.vmem %s2, 128
  %v308 = vld [vmem:[%s307] sm:$0xf]
  %v309 = vld [vmem:[%s307 + $0x4] sm:$0xf]
  %v310 = vld [vmem:[%s307 + $0x8] sm:$0xf]
  %v311 = vld [vmem:[%s307 + $0xc] sm:$0xf]
  %v312 = vld [vmem:[%s307 + $0x10] sm:$0xf]
  %v313 = vld [vmem:[%s307 + $0x14] sm:$0xf]
  %v314 = vld [vmem:[%s307 + $0x18] sm:$0xf]
  %v315 = vld [vmem:[%s307 + $0x1c] sm:$0xf]
  %v316 = vld [vmem:[%s307 + $0x20] sm:$0xf]
  %v317 = vld [vmem:[%s307 + $0x24] sm:$0xf]
  %v318 = vld [vmem:[%s307 + $0x28] sm:$0xf]
  %v319 = vld [vmem:[%s307 + $0x2c] sm:$0xf]
  %v320 = vld [vmem:[%s307 + $0x30] sm:$0xf]
  %v321 = vld [vmem:[%s307 + $0x34] sm:$0xf]
  %v322 = vld [vmem:[%s307 + $0x38] sm:$0xf]
  %v323 = vld [vmem:[%s307 + $0x3c] sm:$0xf]
  %v324 = vlaneseq
  %v325 = vshrl.u32 %v324, 7
  %v326 = vsub.s32 3, %v325
  %v327 = vrot.slane %v18, %v326
  %v344 = vunpack.c.l.b16 %v308
  %v345 = vunpack.c.l.b16 %v309
  %v346 = vunpack.c.l.b16 %v310
  %v347 = vunpack.c.l.b16 %v311
  %v348 = vunpack.c.l.b16 %v312
  %v349 = vunpack.c.l.b16 %v313
  %v350 = vunpack.c.l.b16 %v314
  %v351 = vunpack.c.l.b16 %v315
  %v352 = vunpack.c.l.b16 %v316
  %v353 = vunpack.c.l.b16 %v317
  %v354 = vunpack.c.l.b16 %v318
  %v355 = vunpack.c.l.b16 %v319
  %v356 = vunpack.c.l.b16 %v320
  %v357 = vunpack.c.l.b16 %v321
  %v358 = vunpack.c.l.b16 %v322
  %v359 = vunpack.c.l.b16 %v323
  %v360 = vpack.c.b16 %v345, %v344
  %v361 = vpack.c.b16 %v347, %v346
  %v362 = vpack.c.b16 %v349, %v348
  %v363 = vpack.c.b16 %v351, %v350
  %v364 = vpack.c.b16 %v353, %v352
  %v365 = vpack.c.b16 %v355, %v354
  %v366 = vpack.c.b16 %v357, %v356
  %v367 = vpack.c.b16 %v359, %v358
  %376 = vmatprep.subr.bf16.mxu0 0
  %377 = vmatpush1.bf16.msra.mxu0 %v360
  %378 = vmatprep.subr.bf16.mxu0 0
  %379 = vmatpush1.bf16.msra.mxu0 %v361
  %380 = vmatprep.subr.bf16.mxu0 0
  %381 = vmatpush1.bf16.msra.mxu0 %v362
  %382 = vmatprep.subr.bf16.mxu0 0
  %383 = vmatpush1.bf16.msra.mxu0 %v363
  %384 = vmatprep.subr.bf16.mxu0 0
  %385 = vmatpush1.bf16.msra.mxu0 %v364
  %386 = vmatprep.subr.bf16.mxu0 0
  %387 = vmatpush1.bf16.msra.mxu0 %v365
  %388 = vmatprep.subr.bf16.mxu0 0
  %389 = vmatpush1.bf16.msra.mxu0 %v366
  %390 = vmatprep.subr.bf16.mxu0 0
  %391 = vmatpush1.bf16.msra.mxu0 %v367
  %392 = vmatprep.subr.bf16.mxu0 0
  %393 = vmatpush1.bf16.msra.mxu0 0
  %394 = vmatprep.subr.bf16.mxu0 0
  %395 = vmatpush1.bf16.msra.mxu0 0
  %396 = vmatprep.subr.bf16.mxu0 0
  %397 = vmatpush1.bf16.msra.mxu0 0
  %398 = vmatprep.subr.bf16.mxu0 0
  %399 = vmatpush1.bf16.msra.mxu0 0
  %400 = vmatprep.subr.bf16.mxu0 0
  %401 = vmatpush1.bf16.msra.mxu0 0
  %402 = vmatprep.subr.bf16.mxu0 0
  %403 = vmatpush1.bf16.msra.mxu0 0
  %404 = vmatprep.subr.bf16.mxu0 0
  %405 = vmatpush1.bf16.msra.mxu0 0
  %406 = vmatprep.subr.bf16.mxu0 0
  %407 = vmatpush1.bf16.msra.mxu0 0
  %408 = vmatprep.mubr.bf16.mxu0 0
  %409 = vmatmul.mubr.bf16.gmra.mrb[0].mxu0 %v306
  %v410 = vpop.f32.mrb[0].mxu0
  %v411 = vadd.f32 %v327, %v410
  %v412 = vpop.f32.mrb[0].mxu0
  %v413 = vpop.f32.mrb[0].mxu0
  %v414 = vadd.f32 %v327, %v413
  %v415 = vpop.f32.mrb[0].mxu0
  %416 = vdwg.mxu0
  %v417 = vpack.c.bf16 %v414, %v411
  %v419 = vunpack.c.l.b16 %v417
  %v420 = vunpack.c.h.b16 %v417
  %v421 = vpack.c.b16 %v419, %v419
  %v422 = vpack.c.b16 %v420, %v420
  %425 = vst [vmem:[%s4] sm:$0xf] %v421
  %426 = vst [vmem:[%s4 + $0x4] sm:$0xf] %v422
  // Predicated region
  $region18: #{dqn_forward.1} parent=0 // pred_check
    _
  $region19: #{dqn_forward.1} parent=0 // pred_check_branch
    %428 = sbr.rel (0) target = $region21
  $region20: #{dqn_forward.1} parent=0 // pred_region
    _
  $region21: #{dqn_forward.1} parent=0 // pred_fallthru
    _
  // Predicated region
  $region22: #{dqn_forward.1} parent=0 // pred_check
    _
  $region23: #{dqn_forward.1} parent=0 // pred_check_branch
    %430 = sbr.rel (0) target = $region25
  $region24: #{dqn_forward.1} parent=0 // pred_region
    _
  $region25: #{dqn_forward.1} parent=0 // pred_fallthru
    _

</llo_original>
